<compile_context>
chip_gen: v7x
topology: tpu7x:2x2x1
jax: 0.10.0
libtpu: 0.0.40
codegen_flags: <defaults>
</compile_context>

<pallas_src>
import jax
import jax.numpy as jnp
from jax.experimental import pallas as pl
from jax.experimental.pallas import tpu as pltpu

# --- model hyper-params (small, consistent with the module) -----------------
B = 8            # batch
K = 10           # factor_num (BPR embedding dim)
F = 4            # deepfm fields: user, item, 2 categorical context features
E = 10           # deepfm per-field embedding dim
H = 16           # synthesized deepfm MLP hidden width
CTX = 2 * E      # context_dim fed to the cbpr head
W = 16           # lane width of the packed gather table / weight slab

USER_NUM = 64
ITEM_NUM = 32
FIELD_DIMS = (USER_NUM, ITEM_NUM, 12, 18)   # analogous to [31360, 6807, 12, 18]
FM_ROWS = sum(FIELD_DIMS)                   # 126
FM_FIELD_OFF = tuple(int(sum(FIELD_DIMS[:f])) for f in range(F))   # (0,64,96,108)

# Row offsets of the sub-tables inside the packed gather table.
OFF_USER = 0
OFF_ITEM = USER_NUM                       # 64
OFF_UCTX = USER_NUM + ITEM_NUM            # 96
OFF_FM = OFF_UCTX + USER_NUM              # 160
TBL_ROWS = OFF_FM + FM_ROWS               # 286

S2B = 2 * B                               # stacked (item_i, item_j) batch = 16
NGATHER = (3 + F) * S2B                   # 112 gather rows: user, item, user_ctx, 4 fm fields

# Row offsets inside the packed weight slab (all 8-aligned).
W1_ROW = 0                                # 4 sections of 16 rows (per-field w1)
W2_ROW = 4 * 16                           # 64
HWF_ROW = W2_ROW + 16                     # 80  head weights hit by `feat`
HWM_ROW = HWF_ROW + 16                    # 96  head weights hit by `m`
B1_ROW = HWM_ROW + 16                     # 112
B2_ROW = B1_ROW + 8                       # 120
WSLAB_ROWS = B2_ROW + 8                   # 128


def _cbpr_v3_kernel(idx_ref, tbl_ref, w_ref, out_ref):
  f32 = jnp.float32

  # ---- fused gather: every embedding row the batch needs, in one MXU push ----
  idx = idx_ref[...]                                              # (112, 1) int32
  row_ids = jax.lax.broadcasted_iota(jnp.int32, (NGATHER, TBL_ROWS), 1)
  onehot = (row_ids == idx).astype(f32)                           # (112, 286)
  g = jnp.dot(onehot, tbl_ref[...], preferred_element_type=f32)   # (112, 16)

  u_ext = g[0 * S2B:1 * S2B]    # (2B,16): [embed_user     | 1         | 0...]
  it_ext = g[1 * S2B:2 * S2B]   # (2B,16): [embed_item     | bias_item | 0...]
  uc_ext = g[2 * S2B:3 * S2B]   # (2B,16): [embed_user_ctx | 1         | 0...]

  weights = w_ref[...]                                            # hoist all weights once

  # ---- DeepFM (FM second-order + MLP) on the stacked (i, j) batch ----
  s = jnp.zeros((S2B, W), f32)
  sq = jnp.zeros((S2B, W), f32)
  h_pre = jnp.zeros((S2B, H), f32)
  for f in range(F):                                              # static unroll, F=4
    gf = g[(3 + f) * S2B:(4 + f) * S2B]      # (2B,16): [e_f | fc_f + fm_bias/F | 0...]
    s = s + gf
    sq = sq + gf * gf
    # per-field slice of mlp_w1 (rows >= E are zero, so the fc lane is killed)
    h_pre = h_pre + jnp.dot(
        gf, weights[W1_ROW + f * 16:W1_ROW + (f + 1) * 16, :],
        preferred_element_type=f32)
  h = jnp.maximum(h_pre + weights[B1_ROW:B1_ROW + 1, :], 0.0)     # (2B, H)
  m = jnp.maximum(
      jnp.dot(h, weights[W2_ROW:W2_ROW + 16, :], preferred_element_type=f32)
      + weights[B2_ROW:B2_ROW + 1, :], 0.0)                       # (2B, 16), lanes >= E are 0

  # lane E of `s` = sum(fc) + fm_bias  (fm_bias folded into fc at pack time)
  feat = 0.5 * (s * s - sq) + s[:, E:E + 1]                       # lanes >= E garbage,
  # ...but the head weight rows >= E are zero, so they never contribute.

  # ---- contextual head: [feat | m] @ [embed_context_w | context_bias_w] ----
  head = (jnp.dot(feat, weights[HWF_ROW:HWF_ROW + 16, :], preferred_element_type=f32) +
          jnp.dot(m, weights[HWM_ROW:HWM_ROW + 16, :], preferred_element_type=f32))
  # head lanes 0..K-1 = context embedding, lane K = context bias, rest = 0.

  bpr = jnp.sum(u_ext * it_ext, axis=1, keepdims=True)            # u·e_item + bias_item
  cbpr = jnp.sum(uc_ext * head, axis=1, keepdims=True)            # uc·cemb + cbias
  out_ref[...] = bpr + cbpr                                       # (2B, 1)


def init_params(key):
  ks = jax.random.split(key, 12)
  n_feat = FM_ROWS
  return dict(
      embed_user=0.01 * jax.random.normal(ks[0], (USER_NUM, K), jnp.float32),
      embed_item=0.01 * jax.random.normal(ks[1], (ITEM_NUM, K), jnp.float32),
      bias_item=0.01 * jax.random.normal(ks[2], (ITEM_NUM,), jnp.float32),
      embed_user_ctx=0.01 * jax.random.normal(ks[3], (USER_NUM, K), jnp.float32),
      context_bias_w=0.1 * jax.random.normal(ks[4], (CTX, 1), jnp.float32),
      embed_context_w=0.1 * jax.random.normal(ks[5], (CTX, K), jnp.float32),
      fm_embedding=0.01 * jax.random.normal(ks[6], (n_feat, E), jnp.float32),
      fm_fc=0.01 * jax.random.normal(ks[7], (n_feat, 1), jnp.float32),
      fm_bias=jnp.array([[0.05]], jnp.float32),
      mlp_w1=0.1 * jax.random.normal(ks[8], (F * E, H), jnp.float32),
      mlp_b1=0.01 * jax.random.normal(ks[9], (1, H), jnp.float32),
      mlp_w2=0.1 * jax.random.normal(ks[10], (H, E), jnp.float32),
      mlp_b2=0.01 * jax.random.normal(ks[11], (1, E), jnp.float32),
  )


def pack_params(p):
  """One-time packing of all tables / weights into 2 lane-dense VMEM slabs."""
  f32 = jnp.float32

  def padw(x, rows=None):
    r = x.shape[0] if rows is None else rows
    out = jnp.zeros((r, W), f32)
    return out.at[:x.shape[0], :x.shape[1]].set(x.astype(f32))

  ones_u = jnp.ones((USER_NUM, 1), f32)
  table = jnp.concatenate([
      padw(jnp.concatenate([p["embed_user"], ones_u], axis=1)),                 # rows 0..63
      padw(jnp.concatenate([p["embed_item"], p["bias_item"][:, None]], axis=1)),  # 64..95
      padw(jnp.concatenate([p["embed_user_ctx"], ones_u], axis=1)),             # 96..159
      padw(jnp.concatenate([p["fm_embedding"],
                            p["fm_fc"] + p["fm_bias"][0, 0] / F], axis=1)),     # 160..285
  ], axis=0)                                                                    # (286, 16)

  head_w = jnp.concatenate([p["embed_context_w"], p["context_bias_w"]], axis=1)  # (CTX, K+1)
  w1 = p["mlp_w1"].reshape(F, E, H)
  wslab = jnp.concatenate(
      [padw(w1[f], 16) for f in range(F)] +        # rows   0..63 : per-field mlp w1
      [padw(p["mlp_w2"], 16),                      # rows  64..79 : mlp w2
       padw(head_w[:E], 16),                       # rows  80..95 : head weights for feat
       padw(head_w[E:], 16),                       # rows  96..111: head weights for m
       padw(p["mlp_b1"], 8),                       # row  112     : b1
       padw(p["mlp_b2"], 8)],                      # row  120     : b2
      axis=0)                                      # (128, 16)
  return {"table": table, "wslab": wslab}


def contextual_bpr_v3(packed, user, item_i, item_j, context_i, context_j):
  """user/item_*: int32 (B,); context_*: int32 (B, 2). Returns two (B,) f32."""
  assert user.shape[0] == B
  # Trivial index prep (the only "glue"); gathers themselves happen in-kernel.
  user_s = jnp.concatenate([user, user])
  item_s = jnp.concatenate([item_i, item_j])
  ctx_s = jnp.concatenate([context_i, context_j], axis=0)
  idx = jnp.concatenate([
      user_s + OFF_USER,
      item_s + OFF_ITEM,
      user_s + OFF_UCTX,
      user_s + (OFF_FM + FM_FIELD_OFF[0]),
      item_s + (OFF_FM + FM_FIELD_OFF[1]),
      ctx_s[:, 0] + (OFF_FM + FM_FIELD_OFF[2]),
      ctx_s[:, 1] + (OFF_FM + FM_FIELD_OFF[3]),
  ]).astype(jnp.int32)[:, None]                    # (112, 1)

  vmem = pl.BlockSpec(memory_space=pltpu.MemorySpace.VMEM)
  out = pl.pallas_call(
      _cbpr_v3_kernel,
      out_shape=jax.ShapeDtypeStruct((S2B, 1), jnp.float32),
      in_specs=[vmem, vmem, vmem],
      out_specs=vmem,
  )(idx, packed["table"], packed["wslab"])
  return out[:B, 0], out[B:, 0]


def reference_forward(params, user, item_i, item_j, context_i, context_j):
  """Pure-JAX mirror of the PyTorch forward, for correctness checking."""
  offsets = jnp.array(FM_FIELD_OFF, jnp.int32)

  def bpr(item):
    u = params["embed_user"][user]
    e = params["embed_item"][item]
    return (u * e).sum(-1) + params["bias_item"][item]

  def extract_features(item, ctx):
    x = jnp.concatenate([user[:, None], item[:, None], ctx], axis=1)
    idx = x + offsets[None, :]
    embed_x = params["fm_embedding"][idx]                      # (B, F, E)
    bias = params["fm_bias"][0, 0] + params["fm_fc"][idx][..., 0].sum(1, keepdims=True)
    sos = embed_x.sum(1) ** 2
    ssq = (embed_x ** 2).sum(1)
    feat = 0.5 * (sos - ssq) + bias
    flat = embed_x.reshape(-1, F * E)
    h = jnp.maximum(flat @ params["mlp_w1"] + params["mlp_b1"], 0.0)
    m = jnp.maximum(h @ params["mlp_w2"] + params["mlp_b2"], 0.0)
    return jnp.concatenate([feat, m], axis=1)                  # (B, CTX)

  def cbpr(ctx_feat):
    cbias = (ctx_feat @ params["context_bias_w"]).sum(1)
    cemb = ctx_feat @ params["embed_context_w"]
    cu = params["embed_user_ctx"][user]
    return (cu * cemb).sum(-1) + cbias

  ci = extract_features(item_i, context_i)
  cj = extract_features(item_j, context_j)
  return bpr(item_i) + cbpr(ci), bpr(item_j) + cbpr(cj)


if __name__ == "__main__":
  key = jax.random.PRNGKey(0)
  pkey, k1, k2, k3, k4, k5 = jax.random.split(key, 6)
  params = init_params(pkey)
  packed = pack_params(params)

  user = jax.random.randint(k1, (B,), 0, USER_NUM, jnp.int32)
  item_i = jax.random.randint(k2, (B,), 0, ITEM_NUM, jnp.int32)
  item_j = jax.random.randint(k3, (B,), 0, ITEM_NUM, jnp.int32)
  context_i = jnp.stack(
      [jax.random.randint(k4, (B,), 0, FIELD_DIMS[2], jnp.int32),
       jax.random.randint(k5, (B,), 0, FIELD_DIMS[3], jnp.int32)], axis=1)
  context_j = jnp.stack(
      [jax.random.randint(k5, (B,), 0, FIELD_DIMS[2], jnp.int32),
       jax.random.randint(k4, (B,), 0, FIELD_DIMS[3], jnp.int32)], axis=1)

  fwd = jax.jit(contextual_bpr_v3)
  pi, pj = fwd(packed, user, item_i, item_j, context_i, context_j)
  jax.block_until_ready((pi, pj))

  ri, rj = reference_forward(params, user, item_i, item_j, context_i, context_j)
  assert jnp.allclose(pi, ri, atol=1e-3, rtol=1e-2), (pi, ri)
  assert jnp.allclose(pj, rj, atol=1e-3, rtol=1e-2), (pj, rj)

  print("KERNEL_OK")
</pallas_src>

<mosaic_0001>
module attributes {stable_mosaic.version = 11 : i64} {
  func.func @_cbpr_v3_kernel(%arg0: memref<112x1xi32, #tpu.memory_space<vmem>>, %arg1: memref<286x16xf32, #tpu.memory_space<vmem>>, %arg2: memref<128x16xf32, #tpu.memory_space<vmem>>, %arg3: memref<16x1xf32, #tpu.memory_space<vmem>>) attributes {dimension_semantics = [], scalar_prefetch = 0 : i64, scratch_operands = 0 : i64, tpu.core_type = #tpu.core_type<tc>} {
    %c0 = arith.constant 0 : index
    %c0_0 = arith.constant 0 : index
    %0 = vector.load %arg0[%c0, %c0_0] : memref<112x1xi32, #tpu.memory_space<vmem>>, vector<112x1xi32>
    %1 = tpu.iota {dimensions = array<i32: 1>} : vector<112x286xi32>
    %2 = vector.broadcast %0 : vector<112x1xi32> to vector<112x286xi32>
    %3 = arith.cmpi eq, %1, %2 : vector<112x286xi32>
    %4 = arith.extui %3 : vector<112x286xi1> to vector<112x286xi32>
    %5 = arith.sitofp %4 : vector<112x286xi32> to vector<112x286xf32>
    %c0_1 = arith.constant 0 : index
    %c0_2 = arith.constant 0 : index
    %6 = vector.load %arg1[%c0_1, %c0_2] : memref<286x16xf32, #tpu.memory_space<vmem>>, vector<286x16xf32>
    %cst = arith.constant dense<0.000000e+00> : vector<112x16xf32>
    %7 = tpu.matmul %5, %6, %cst {dimension_numbers = #tpu.dot_dimension_numbers<[1], [0], [0], [1], [0, 0, 1, 1], [], []>} : vector<112x286xf32>, vector<286x16xf32>, vector<112x16xf32> -> vector<112x16xf32>
    %8 = vector.extract_strided_slice %7 {offsets = [0, 0], sizes = [16, 16], strides = [1, 1]} : vector<112x16xf32> to vector<16x16xf32>
    %9 = vector.extract_strided_slice %7 {offsets = [16, 0], sizes = [16, 16], strides = [1, 1]} : vector<112x16xf32> to vector<16x16xf32>
    %10 = vector.extract_strided_slice %7 {offsets = [32, 0], sizes = [16, 16], strides = [1, 1]} : vector<112x16xf32> to vector<16x16xf32>
    %c0_3 = arith.constant 0 : index
    %c0_4 = arith.constant 0 : index
    %11 = vector.load %arg2[%c0_3, %c0_4] : memref<128x16xf32, #tpu.memory_space<vmem>>, vector<128x16xf32>
    %cst_5 = arith.constant 0.000000e+00 : f32
    %12 = vector.broadcast %cst_5 : f32 to vector<16x16xf32>
    %cst_6 = arith.constant 0.000000e+00 : f32
    %13 = vector.broadcast %cst_6 : f32 to vector<16x16xf32>
    %cst_7 = arith.constant 0.000000e+00 : f32
    %14 = vector.broadcast %cst_7 : f32 to vector<16x16xf32>
    %15 = vector.extract_strided_slice %7 {offsets = [48, 0], sizes = [16, 16], strides = [1, 1]} : vector<112x16xf32> to vector<16x16xf32>
    %16 = arith.addf %12, %15 : vector<16x16xf32>
    %17 = arith.mulf %15, %15 : vector<16x16xf32>
    %18 = arith.addf %13, %17 : vector<16x16xf32>
    %19 = vector.extract_strided_slice %11 {offsets = [0, 0], sizes = [16, 16], strides = [1, 1]} : vector<128x16xf32> to vector<16x16xf32>
    %cst_8 = arith.constant dense<0.000000e+00> : vector<16x16xf32>
    %20 = tpu.matmul %15, %19, %cst_8 {dimension_numbers = #tpu.dot_dimension_numbers<[1], [0], [0], [1], [0, 0, 1, 1], [], []>} : vector<16x16xf32>, vector<16x16xf32>, vector<16x16xf32> -> vector<16x16xf32>
    %21 = arith.addf %14, %20 : vector<16x16xf32>
    %22 = vector.extract_strided_slice %7 {offsets = [64, 0], sizes = [16, 16], strides = [1, 1]} : vector<112x16xf32> to vector<16x16xf32>
    %23 = arith.addf %16, %22 : vector<16x16xf32>
    %24 = arith.mulf %22, %22 : vector<16x16xf32>
    %25 = arith.addf %18, %24 : vector<16x16xf32>
    %26 = vector.extract_strided_slice %11 {offsets = [16, 0], sizes = [16, 16], strides = [1, 1]} : vector<128x16xf32> to vector<16x16xf32>
    %cst_9 = arith.constant dense<0.000000e+00> : vector<16x16xf32>
    %27 = tpu.matmul %22, %26, %cst_9 {dimension_numbers = #tpu.dot_dimension_numbers<[1], [0], [0], [1], [0, 0, 1, 1], [], []>} : vector<16x16xf32>, vector<16x16xf32>, vector<16x16xf32> -> vector<16x16xf32>
    %28 = arith.addf %21, %27 : vector<16x16xf32>
    %29 = vector.extract_strided_slice %7 {offsets = [80, 0], sizes = [16, 16], strides = [1, 1]} : vector<112x16xf32> to vector<16x16xf32>
    %30 = arith.addf %23, %29 : vector<16x16xf32>
    %31 = arith.mulf %29, %29 : vector<16x16xf32>
    %32 = arith.addf %25, %31 : vector<16x16xf32>
    %33 = vector.extract_strided_slice %11 {offsets = [32, 0], sizes = [16, 16], strides = [1, 1]} : vector<128x16xf32> to vector<16x16xf32>
    %cst_10 = arith.constant dense<0.000000e+00> : vector<16x16xf32>
    %34 = tpu.matmul %29, %33, %cst_10 {dimension_numbers = #tpu.dot_dimension_numbers<[1], [0], [0], [1], [0, 0, 1, 1], [], []>} : vector<16x16xf32>, vector<16x16xf32>, vector<16x16xf32> -> vector<16x16xf32>
    %35 = arith.addf %28, %34 : vector<16x16xf32>
    %36 = vector.extract_strided_slice %7 {offsets = [96, 0], sizes = [16, 16], strides = [1, 1]} : vector<112x16xf32> to vector<16x16xf32>
    %37 = arith.addf %30, %36 : vector<16x16xf32>
    %38 = arith.mulf %36, %36 : vector<16x16xf32>
    %39 = arith.addf %32, %38 : vector<16x16xf32>
    %40 = vector.extract_strided_slice %11 {offsets = [48, 0], sizes = [16, 16], strides = [1, 1]} : vector<128x16xf32> to vector<16x16xf32>
    %cst_11 = arith.constant dense<0.000000e+00> : vector<16x16xf32>
    %41 = tpu.matmul %36, %40, %cst_11 {dimension_numbers = #tpu.dot_dimension_numbers<[1], [0], [0], [1], [0, 0, 1, 1], [], []>} : vector<16x16xf32>, vector<16x16xf32>, vector<16x16xf32> -> vector<16x16xf32>
    %42 = arith.addf %35, %41 : vector<16x16xf32>
    %43 = vector.extract_strided_slice %11 {offsets = [112, 0], sizes = [1, 16], strides = [1, 1]} : vector<128x16xf32> to vector<1x16xf32>
    %44 = vector.broadcast %43 : vector<1x16xf32> to vector<16x16xf32>
    %45 = arith.addf %42, %44 : vector<16x16xf32>
    %cst_12 = arith.constant 0.000000e+00 : f32
    %46 = vector.broadcast %cst_12 : f32 to vector<16x16xf32>
    %47 = arith.maximumf %45, %46 : vector<16x16xf32>
    %48 = vector.extract_strided_slice %11 {offsets = [64, 0], sizes = [16, 16], strides = [1, 1]} : vector<128x16xf32> to vector<16x16xf32>
    %cst_13 = arith.constant dense<0.000000e+00> : vector<16x16xf32>
    %49 = tpu.matmul %47, %48, %cst_13 {dimension_numbers = #tpu.dot_dimension_numbers<[1], [0], [0], [1], [0, 0, 1, 1], [], []>} : vector<16x16xf32>, vector<16x16xf32>, vector<16x16xf32> -> vector<16x16xf32>
    %50 = vector.extract_strided_slice %11 {offsets = [120, 0], sizes = [1, 16], strides = [1, 1]} : vector<128x16xf32> to vector<1x16xf32>
    %51 = vector.broadcast %50 : vector<1x16xf32> to vector<16x16xf32>
    %52 = arith.addf %49, %51 : vector<16x16xf32>
    %cst_14 = arith.constant 0.000000e+00 : f32
    %53 = vector.broadcast %cst_14 : f32 to vector<16x16xf32>
    %54 = arith.maximumf %52, %53 : vector<16x16xf32>
    %55 = arith.mulf %37, %37 : vector<16x16xf32>
    %56 = arith.subf %55, %39 : vector<16x16xf32>
    %cst_15 = arith.constant 5.000000e-01 : f32
    %57 = vector.broadcast %cst_15 : f32 to vector<16x16xf32>
    %58 = arith.mulf %57, %56 : vector<16x16xf32>
    %59 = vector.extract_strided_slice %37 {offsets = [0, 10], sizes = [16, 1], strides = [1, 1]} : vector<16x16xf32> to vector<16x1xf32>
    %60 = vector.broadcast %59 : vector<16x1xf32> to vector<16x16xf32>
    %61 = arith.addf %58, %60 : vector<16x16xf32>
    %62 = vector.extract_strided_slice %11 {offsets = [80, 0], sizes = [16, 16], strides = [1, 1]} : vector<128x16xf32> to vector<16x16xf32>
    %cst_16 = arith.constant dense<0.000000e+00> : vector<16x16xf32>
    %63 = tpu.matmul %61, %62, %cst_16 {dimension_numbers = #tpu.dot_dimension_numbers<[1], [0], [0], [1], [0, 0, 1, 1], [], []>} : vector<16x16xf32>, vector<16x16xf32>, vector<16x16xf32> -> vector<16x16xf32>
    %64 = vector.extract_strided_slice %11 {offsets = [96, 0], sizes = [16, 16], strides = [1, 1]} : vector<128x16xf32> to vector<16x16xf32>
    %cst_17 = arith.constant dense<0.000000e+00> : vector<16x16xf32>
    %65 = tpu.matmul %54, %64, %cst_17 {dimension_numbers = #tpu.dot_dimension_numbers<[1], [0], [0], [1], [0, 0, 1, 1], [], []>} : vector<16x16xf32>, vector<16x16xf32>, vector<16x16xf32> -> vector<16x16xf32>
    %66 = arith.addf %63, %65 : vector<16x16xf32>
    %67 = arith.mulf %8, %9 : vector<16x16xf32>
    %cst_18 = arith.constant dense<0.000000e+00> : vector<16xf32>
    %68 = vector.multi_reduction <add>, %67, %cst_18 [1] : vector<16x16xf32> to vector<16xf32>
    %69 = vector.shape_cast %68 : vector<16xf32> to vector<16x1xf32>
    %70 = arith.mulf %10, %66 : vector<16x16xf32>
    %cst_19 = arith.constant dense<0.000000e+00> : vector<16xf32>
    %71 = vector.multi_reduction <add>, %70, %cst_19 [1] : vector<16x16xf32> to vector<16xf32>
    %72 = vector.shape_cast %71 : vector<16xf32> to vector<16x1xf32>
    %73 = arith.addf %69, %72 : vector<16x1xf32>
    %c0_20 = arith.constant 0 : index
    %c0_21 = arith.constant 0 : index
    %74 = vector.load %arg3[%c0_20, %c0_21] : memref<16x1xf32, #tpu.memory_space<vmem>>, vector<16x1xf32>
    tpu.vector_store %arg3[%c0_20, %c0_21], %73 {strides = array<i32>} : memref<16x1xf32, #tpu.memory_space<vmem>>, vector<16x1xf32>,
    return
  }
}

</mosaic_0001>

<llo_original>
// kernel: contextual_bpr_v3.1
$region0: #{contextual_bpr_v3.1}
  #allocation0 [shape = 'u32[]', space=smem, size = 0x4, offset = 0x4, fixed_abs, tag = 'smem constant byte address 0x4 - core index']
  #allocation1 [shape = 'u32[144,128]{1,0:T(1,128)}', space=vmem, size = 0x12000, scoped, tag = 'internal scratch']
  %s0 = inlined_call_operand.vmem [shape: s32[112,1], index: 0, kind: input, shape index: {}]
  %s1 = inlined_call_operand.vmem [shape: f32[286,16], index: 1, kind: input, shape index: {}]
  %s2 = inlined_call_operand.vmem [shape: f32[128,16], index: 2, kind: input, shape index: {}]
  %s3 = inlined_call_operand.vmem [shape: f32[16,1], index: 3, kind: output, shape index: {}]
  %s4 = sld [smem:[#allocation0]]
  $region22: #{contextual_bpr_v3.1} parent=0
    _
  %s6 = ssub.s32 1, %s4
  %s7 = scalar_select 0, %s6, %s4
  // Predicated region
  $region2: #{contextual_bpr_v3.1} parent=0 // pred_check
    _
  $region3: #{contextual_bpr_v3.1} parent=0 // pred_check_branch
    %9 = sbr.rel (0) target = $region5
  $region4: #{contextual_bpr_v3.1} parent=0 // pred_region
    _
  $region5: #{contextual_bpr_v3.1} parent=0 // pred_fallthru
    _
  // Predicated region
  $region6: #{contextual_bpr_v3.1} parent=0 // pred_check
    _
  $region7: #{contextual_bpr_v3.1} parent=0 // pred_check_branch
    %11 = sbr.rel (0) target = $region9
  $region8: #{contextual_bpr_v3.1} parent=0 // pred_region
    _
  $region9: #{contextual_bpr_v3.1} parent=0 // pred_fallthru
    _
  // Predicated region
  $region10: #{contextual_bpr_v3.1} parent=0 // pred_check
    _
  $region11: #{contextual_bpr_v3.1} parent=0 // pred_check_branch
    %13 = sbr.rel (0) target = $region13
  $region12: #{contextual_bpr_v3.1} parent=0 // pred_region
    _
  $region13: #{contextual_bpr_v3.1} parent=0 // pred_fallthru
    _
  %v14 = vld [vmem:[%s0] sm:$0xff]
  %v15 = vld [vmem:[%s0 + $0x8] sm:$0xff]
  %v16 = vld [vmem:[%s0 + $0x10] sm:$0xff]
  %v17 = vld [vmem:[%s0 + $0x18] sm:$0xff]
  %v18 = vld [vmem:[%s0 + $0x20] sm:$0xff]
  %v19 = vld [vmem:[%s0 + $0x28] sm:$0xff]
  %v20 = vld [vmem:[%s0 + $0x30] sm:$0xff]
  %v21 = vld [vmem:[%s0 + $0x38] sm:$0xff]
  %v22 = vld [vmem:[%s0 + $0x40] sm:$0xff]
  %v23 = vld [vmem:[%s0 + $0x48] sm:$0xff]
  %v24 = vld [vmem:[%s0 + $0x50] sm:$0xff]
  %v25 = vld [vmem:[%s0 + $0x58] sm:$0xff]
  %v26 = vld [vmem:[%s0 + $0x60] sm:$0xff]
  %v27 = vld [vmem:[%s0 + $0x68] sm:$0xff]
  %v28 = vlaneseq
  %v29 = vand.u32 %v28, 127
  %v30 = vadd.s32 %v29, 128
  %v31 = vadd.s32 %v29, 256
  %32 = vset.pattern.permute.xlu0 0
  %33 = vperm.xlu0 %32, %v14
  %v34 = vpop.permute.xlu0 %33
  %35 = vset.pattern.permute.xlu0 0
  %36 = vperm.xlu0 %35, %v15
  %v37 = vpop.permute.xlu0 %36
  %38 = vset.pattern.permute.xlu0 0
  %39 = vperm.xlu0 %38, %v16
  %v40 = vpop.permute.xlu0 %39
  %41 = vset.pattern.permute.xlu0 0
  %42 = vperm.xlu0 %41, %v17
  %v43 = vpop.permute.xlu0 %42
  %44 = vset.pattern.permute.xlu0 0
  %45 = vperm.xlu0 %44, %v18
  %v46 = vpop.permute.xlu0 %45
  %47 = vset.pattern.permute.xlu0 0
  %48 = vperm.xlu0 %47, %v19
  %v49 = vpop.permute.xlu0 %48
  %50 = vset.pattern.permute.xlu0 0
  %51 = vperm.xlu0 %50, %v20
  %v52 = vpop.permute.xlu0 %51
  %53 = vset.pattern.permute.xlu0 0
  %54 = vperm.xlu0 %53, %v21
  %v55 = vpop.permute.xlu0 %54
  %56 = vset.pattern.permute.xlu0 0
  %57 = vperm.xlu0 %56, %v22
  %v58 = vpop.permute.xlu0 %57
  %59 = vset.pattern.permute.xlu0 0
  %60 = vperm.xlu0 %59, %v23
  %v61 = vpop.permute.xlu0 %60
  %62 = vset.pattern.permute.xlu0 0
  %63 = vperm.xlu0 %62, %v24
  %v64 = vpop.permute.xlu0 %63
  %65 = vset.pattern.permute.xlu0 0
  %66 = vperm.xlu0 %65, %v25
  %v67 = vpop.permute.xlu0 %66
  %68 = vset.pattern.permute.xlu0 0
  %69 = vperm.xlu0 %68, %v26
  %v70 = vpop.permute.xlu0 %69
  %71 = vset.pattern.permute.xlu0 0
  %72 = vperm.xlu0 %71, %v27
  %v73 = vpop.permute.xlu0 %72
  %vm74 = vcmp.eq.s32.totalorder %v29, %v34
  %vm75 = vcmp.eq.s32.totalorder %v30, %v34
  %vm76 = vcmp.eq.s32.totalorder %v31, %v34
  %vm77 = vcmp.eq.s32.totalorder %v29, %v37
  %vm78 = vcmp.eq.s32.totalorder %v30, %v37
  %vm79 = vcmp.eq.s32.totalorder %v31, %v37
  %vm80 = vcmp.eq.s32.totalorder %v29, %v40
  %vm81 = vcmp.eq.s32.totalorder %v30, %v40
  %vm82 = vcmp.eq.s32.totalorder %v31, %v40
  %vm83 = vcmp.eq.s32.totalorder %v29, %v43
  %vm84 = vcmp.eq.s32.totalorder %v30, %v43
  %vm85 = vcmp.eq.s32.totalorder %v31, %v43
  %vm86 = vcmp.eq.s32.totalorder %v29, %v46
  %vm87 = vcmp.eq.s32.totalorder %v30, %v46
  %vm88 = vcmp.eq.s32.totalorder %v31, %v46
  %vm89 = vcmp.eq.s32.totalorder %v29, %v49
  %vm90 = vcmp.eq.s32.totalorder %v30, %v49
  %vm91 = vcmp.eq.s32.totalorder %v31, %v49
  %vm92 = vcmp.eq.s32.totalorder %v29, %v52
  %vm93 = vcmp.eq.s32.totalorder %v30, %v52
  %vm94 = vcmp.eq.s32.totalorder %v31, %v52
  %vm95 = vcmp.eq.s32.totalorder %v29, %v55
  %vm96 = vcmp.eq.s32.totalorder %v30, %v55
  %vm97 = vcmp.eq.s32.totalorder %v31, %v55
  %vm98 = vcmp.eq.s32.totalorder %v29, %v58
  %vm99 = vcmp.eq.s32.totalorder %v30, %v58
  %vm100 = vcmp.eq.s32.totalorder %v31, %v58
  %vm101 = vcmp.eq.s32.totalorder %v29, %v61
  %vm102 = vcmp.eq.s32.totalorder %v30, %v61
  %vm103 = vcmp.eq.s32.totalorder %v31, %v61
  %vm104 = vcmp.eq.s32.totalorder %v29, %v64
  %vm105 = vcmp.eq.s32.totalorder %v30, %v64
  %vm106 = vcmp.eq.s32.totalorder %v31, %v64
  %vm107 = vcmp.eq.s32.totalorder %v29, %v67
  %vm108 = vcmp.eq.s32.totalorder %v30, %v67
  %vm109 = vcmp.eq.s32.totalorder %v31, %v67
  %vm110 = vcmp.eq.s32.totalorder %v29, %v70
  %vm111 = vcmp.eq.s32.totalorder %v30, %v70
  %vm112 = vcmp.eq.s32.totalorder %v31, %v70
  %vm113 = vcmp.eq.s32.totalorder %v29, %v73
  %vm114 = vcmp.eq.s32.totalorder %v30, %v73
  %vm115 = vcmp.eq.s32.totalorder %v31, %v73
  %v116 = vsel %vm74, 1, 0
  %v117 = vsel %vm75, 1, 0
  %v118 = vsel %vm76, 1, 0
  %v119 = vsel %vm77, 1, 0
  %v120 = vsel %vm78, 1, 0
  %v121 = vsel %vm79, 1, 0
  %v122 = vsel %vm80, 1, 0
  %v123 = vsel %vm81, 1, 0
  %v124 = vsel %vm82, 1, 0
  %v125 = vsel %vm83, 1, 0
  %v126 = vsel %vm84, 1, 0
  %v127 = vsel %vm85, 1, 0
  %v128 = vsel %vm86, 1, 0
  %v129 = vsel %vm87, 1, 0
  %v130 = vsel %vm88, 1, 0
  %v131 = vsel %vm89, 1, 0
  %v132 = vsel %vm90, 1, 0
  %v133 = vsel %vm91, 1, 0
  %v134 = vsel %vm92, 1, 0
  %v135 = vsel %vm93, 1, 0
  %v136 = vsel %vm94, 1, 0
  %v137 = vsel %vm95, 1, 0
  %v138 = vsel %vm96, 1, 0
  %v139 = vsel %vm97, 1, 0
  %v140 = vsel %vm98, 1, 0
  %v141 = vsel %vm99, 1, 0
  %v142 = vsel %vm100, 1, 0
  %v143 = vsel %vm101, 1, 0
  %v144 = vsel %vm102, 1, 0
  %v145 = vsel %vm103, 1, 0
  %v146 = vsel %vm104, 1, 0
  %v147 = vsel %vm105, 1, 0
  %v148 = vsel %vm106, 1, 0
  %v149 = vsel %vm107, 1, 0
  %v150 = vsel %vm108, 1, 0
  %v151 = vsel %vm109, 1, 0
  %v152 = vsel %vm110, 1, 0
  %v153 = vsel %vm111, 1, 0
  %v154 = vsel %vm112, 1, 0
  %v155 = vsel %vm113, 1, 0
  %v156 = vsel %vm114, 1, 0
  %v157 = vsel %vm115, 1, 0
  %v158 = vcvt.s32.f32 %v116
  %v159 = vcvt.s32.f32 %v117
  %v160 = vcvt.s32.f32 %v118
  %v161 = vcvt.s32.f32 %v119
  %v162 = vcvt.s32.f32 %v120
  %v163 = vcvt.s32.f32 %v121
  %v164 = vcvt.s32.f32 %v122
  %v165 = vcvt.s32.f32 %v123
  %v166 = vcvt.s32.f32 %v124
  %v167 = vcvt.s32.f32 %v125
  %v168 = vcvt.s32.f32 %v126
  %v169 = vcvt.s32.f32 %v127
  %v170 = vcvt.s32.f32 %v128
  %v171 = vcvt.s32.f32 %v129
  %v172 = vcvt.s32.f32 %v130
  %v173 = vcvt.s32.f32 %v131
  %v174 = vcvt.s32.f32 %v132
  %v175 = vcvt.s32.f32 %v133
  %v176 = vcvt.s32.f32 %v134
  %v177 = vcvt.s32.f32 %v135
  %v178 = vcvt.s32.f32 %v136
  %v179 = vcvt.s32.f32 %v137
  %v180 = vcvt.s32.f32 %v138
  %v181 = vcvt.s32.f32 %v139
  %v182 = vcvt.s32.f32 %v140
  %v183 = vcvt.s32.f32 %v141
  %v184 = vcvt.s32.f32 %v142
  %v185 = vcvt.s32.f32 %v143
  %v186 = vcvt.s32.f32 %v144
  %v187 = vcvt.s32.f32 %v145
  %v188 = vcvt.s32.f32 %v146
  %v189 = vcvt.s32.f32 %v147
  %v190 = vcvt.s32.f32 %v148
  %v191 = vcvt.s32.f32 %v149
  %v192 = vcvt.s32.f32 %v150
  %v193 = vcvt.s32.f32 %v151
  %v194 = vcvt.s32.f32 %v152
  %v195 = vcvt.s32.f32 %v153
  %v196 = vcvt.s32.f32 %v154
  %v197 = vcvt.s32.f32 %v155
  %v198 = vcvt.s32.f32 %v156
  %v199 = vcvt.s32.f32 %v157
  %v200 = vld [vmem:[%s1] sm:$0xff]
  %v201 = vld [vmem:[%s1 + $0x8] sm:$0xff]
  %v202 = vld [vmem:[%s1 + $0x10] sm:$0xff]
  %v203 = vld [vmem:[%s1 + $0x18] sm:$0xff]
  %v204 = vld [vmem:[%s1 + $0x20] sm:$0xff]
  %v205 = vld [vmem:[%s1 + $0x28] sm:$0xff]
  %v206 = vld [vmem:[%s1 + $0x30] sm:$0xff]
  %v207 = vld [vmem:[%s1 + $0x38] sm:$0xff]
  %v208 = vld [vmem:[%s1 + $0x40] sm:$0xff]
  %v209 = vld [vmem:[%s1 + $0x48] sm:$0xff]
  %v210 = vld [vmem:[%s1 + $0x50] sm:$0xff]
  %v211 = vld [vmem:[%s1 + $0x58] sm:$0xff]
  %v212 = vld [vmem:[%s1 + $0x60] sm:$0xff]
  %v213 = vld [vmem:[%s1 + $0x68] sm:$0xff]
  %v214 = vld [vmem:[%s1 + $0x70] sm:$0xff]
  %v215 = vld [vmem:[%s1 + $0x78] sm:$0xff]
  %v216 = vld [vmem:[%s1 + $0x80] sm:$0xff]
  %v217 = vld [vmem:[%s1 + $0x88] sm:$0xff]
  %v218 = vld [vmem:[%s1 + $0x90] sm:$0xff]
  %v219 = vld [vmem:[%s1 + $0x98] sm:$0xff]
  %v220 = vld [vmem:[%s1 + $0xa0] sm:$0xff]
  %v221 = vld [vmem:[%s1 + $0xa8] sm:$0xff]
  %v222 = vld [vmem:[%s1 + $0xb0] sm:$0xff]
  %v223 = vld [vmem:[%s1 + $0xb8] sm:$0xff]
  %v224 = vld [vmem:[%s1 + $0xc0] sm:$0xff]
  %v225 = vld [vmem:[%s1 + $0xc8] sm:$0xff]
  %v226 = vld [vmem:[%s1 + $0xd0] sm:$0xff]
  %v227 = vld [vmem:[%s1 + $0xd8] sm:$0xff]
  %v228 = vld [vmem:[%s1 + $0xe0] sm:$0xff]
  %v229 = vld [vmem:[%s1 + $0xe8] sm:$0xff]
  %v230 = vld [vmem:[%s1 + $0xf0] sm:$0xff]
  %v231 = vld [vmem:[%s1 + $0xf8] sm:$0xff]
  %v232 = vld [vmem:[%s1 + $0x100] sm:$0xff]
  %v233 = vld [vmem:[%s1 + $0x108] sm:$0xff]
  %v234 = vld [vmem:[%s1 + $0x110] sm:$0xff]
  %v235 = vld [vmem:[%s1 + $0x118] sm:$0x3f]
  %vm236 = vcmask 244736
  %v238 = vsel %vm236, %v160, 0
  %v241 = vsel %vm236, %v163, 0
  %v244 = vsel %vm236, %v166, 0
  %v247 = vsel %vm236, %v169, 0
  %v250 = vsel %vm236, %v172, 0
  %v253 = vsel %vm236, %v175, 0
  %v256 = vsel %vm236, %v178, 0
  %v259 = vsel %vm236, %v181, 0
  %v262 = vsel %vm236, %v184, 0
  %v265 = vsel %vm236, %v187, 0
  %v268 = vsel %vm236, %v190, 0
  %v271 = vsel %vm236, %v193, 0
  %v274 = vsel %vm236, %v196, 0
  %v277 = vsel %vm236, %v199, 0
  %vm279 = vcmask 1045504
  %v281 = vsel %vm279, %v235, 0
  %283 = vmatprep.subr.mxu0 0.0
  %284 = vmatpush1.msra.mxu0 %v200
  %285 = vmatprep.subr.mxu0 0.0
  %286 = vmatpush1.msra.mxu0 %v201
  %287 = vmatprep.subr.mxu0 0.0
  %288 = vmatpush1.msra.mxu0 %v202
  %289 = vmatprep.subr.mxu0 0.0
  %290 = vmatpush1.msra.mxu0 %v203
  %291 = vmatprep.subr.mxu0 0.0
  %292 = vmatpush1.msra.mxu0 %v204
  %293 = vmatprep.subr.mxu0 0.0
  %294 = vmatpush1.msra.mxu0 %v205
  %295 = vmatprep.subr.mxu0 0.0
  %296 = vmatpush1.msra.mxu0 %v206
  %297 = vmatprep.subr.mxu0 0.0
  %298 = vmatpush1.msra.mxu0 %v207
  %299 = vmatprep.subr.mxu0 0.0
  %300 = vmatpush1.msra.mxu0 %v208
  %301 = vmatprep.subr.mxu0 0.0
  %302 = vmatpush1.msra.mxu0 %v209
  %303 = vmatprep.subr.mxu0 0.0
  %304 = vmatpush1.msra.mxu0 %v210
  %305 = vmatprep.subr.mxu0 0.0
  %306 = vmatpush1.msra.mxu0 %v211
  %307 = vmatprep.subr.mxu0 0.0
  %308 = vmatpush1.msra.mxu0 %v212
  %309 = vmatprep.subr.mxu0 0.0
  %310 = vmatpush1.msra.mxu0 %v213
  %311 = vmatprep.subr.mxu0 0.0
  %312 = vmatpush1.msra.mxu0 %v214
  %313 = vmatprep.subr.mxu0 0.0
  %314 = vmatpush1.msra.mxu0 %v215
  %315 = vmatprep.subr.mxu0 0.0
  %316 = vmatpush1.msra.mxu0 %v216
  %317 = vmatprep.subr.mxu0 0.0
  %318 = vmatpush1.msra.mxu0 %v217
  %319 = vmatprep.subr.mxu0 0.0
  %320 = vmatpush1.msra.mxu0 %v218
  %321 = vmatprep.subr.mxu0 0.0
  %322 = vmatpush1.msra.mxu0 %v219
  %323 = vmatprep.subr.mxu0 0.0
  %324 = vmatpush1.msra.mxu0 %v220
  %325 = vmatprep.subr.mxu0 0.0
  %326 = vmatpush1.msra.mxu0 %v221
  %327 = vmatprep.subr.mxu0 0.0
  %328 = vmatpush1.msra.mxu0 %v222
  %329 = vmatprep.subr.mxu0 0.0
  %330 = vmatpush1.msra.mxu0 %v223
  %331 = vmatprep.subr.mxu0 0.0
  %332 = vmatpush1.msra.mxu0 %v224
  %333 = vmatprep.subr.mxu0 0.0
  %334 = vmatpush1.msra.mxu0 %v225
  %335 = vmatprep.subr.mxu0 0.0
  %336 = vmatpush1.msra.mxu0 %v226
  %337 = vmatprep.subr.mxu0 0.0
  %338 = vmatpush1.msra.mxu0 %v227
  %339 = vmatprep.subr.mxu0 0.0
  %340 = vmatpush1.msra.mxu0 %v228
  %341 = vmatprep.subr.mxu0 0.0
  %342 = vmatpush1.msra.mxu0 %v229
  %343 = vmatprep.subr.mxu0 0.0
  %344 = vmatpush1.msra.mxu0 %v230
  %345 = vmatprep.subr.mxu0 0.0
  %346 = vmatpush1.msra.mxu0 %v231
  %347 = vmatprep.mubr.f32.mxu0 %v159
  %348 = vmatmul.mubr.f32.gmra.mrb[0].mxu0 %v158
  %v349 = vpop.f32.mrb[0].mxu0
  %v350 = vadd.f32 0.0, %v349
  %v351 = vpop.f32.mrb[0].mxu0
  %352 = vmatprep.mubr.f32.mxu0 %v162
  %353 = vmatmul.mubr.f32.gmra.mrb[0].mxu0 %v161
  %v354 = vpop.f32.mrb[0].mxu0
  %v355 = vadd.f32 0.0, %v354
  %v356 = vpop.f32.mrb[0].mxu0
  %357 = vmatprep.mubr.f32.mxu0 %v165
  %358 = vmatmul.mubr.f32.gmra.mrb[0].mxu0 %v164
  %v359 = vpop.f32.mrb[0].mxu0
  %v360 = vadd.f32 0.0, %v359
  %v361 = vpop.f32.mrb[0].mxu0
  %362 = vmatprep.mubr.f32.mxu0 %v168
  %363 = vmatmul.mubr.f32.gmra.mrb[0].mxu0 %v167
  %v364 = vpop.f32.mrb[0].mxu0
  %v365 = vadd.f32 0.0, %v364
  %v366 = vpop.f32.mrb[0].mxu0
  %367 = vmatprep.mubr.f32.mxu0 %v171
  %368 = vmatmul.mubr.f32.gmra.mrb[0].mxu0 %v170
  %v369 = vpop.f32.mrb[0].mxu0
  %v370 = vadd.f32 0.0, %v369
  %v371 = vpop.f32.mrb[0].mxu0
  %372 = vmatprep.mubr.f32.mxu0 %v174
  %373 = vmatmul.mubr.f32.gmra.mrb[0].mxu0 %v173
  %v374 = vpop.f32.mrb[0].mxu0
  %v375 = vadd.f32 0.0, %v374
  %v376 = vpop.f32.mrb[0].mxu0
  %377 = vmatprep.mubr.f32.mxu0 %v177
  %378 = vmatmul.mubr.f32.gmra.mrb[0].mxu0 %v176
  %v379 = vpop.f32.mrb[0].mxu0
  %v380 = vadd.f32 0.0, %v379
  %v381 = vpop.f32.mrb[0].mxu0
  %382 = vmatprep.mubr.f32.mxu0 %v180
  %383 = vmatmul.mubr.f32.gmra.mrb[0].mxu0 %v179
  %v384 = vpop.f32.mrb[0].mxu0
  %v385 = vadd.f32 0.0, %v384
  %v386 = vpop.f32.mrb[0].mxu0
  %387 = vmatprep.mubr.f32.mxu0 %v183
  %388 = vmatmul.mubr.f32.gmra.mrb[0].mxu0 %v182
  %v389 = vpop.f32.mrb[0].mxu0
  %v390 = vadd.f32 0.0, %v389
  %v391 = vpop.f32.mrb[0].mxu0
  %392 = vmatprep.mubr.f32.mxu0 %v186
  %393 = vmatmul.mubr.f32.gmra.mrb[0].mxu0 %v185
  %v394 = vpop.f32.mrb[0].mxu0
  %v395 = vadd.f32 0.0, %v394
  %v396 = vpop.f32.mrb[0].mxu0
  %397 = vmatprep.mubr.f32.mxu0 %v189
  %398 = vmatmul.mubr.f32.gmra.mrb[0].mxu0 %v188
  %v399 = vpop.f32.mrb[0].mxu0
  %v400 = vadd.f32 0.0, %v399
  %v401 = vpop.f32.mrb[0].mxu0
  %402 = vmatprep.mubr.f32.mxu0 %v192
  %403 = vmatmul.mubr.f32.gmra.mrb[0].mxu0 %v191
  %v404 = vpop.f32.mrb[0].mxu0
  %v405 = vadd.f32 0.0, %v404
  %v406 = vpop.f32.mrb[0].mxu0
  %407 = vmatprep.mubr.f32.mxu0 %v195
  %408 = vmatmul.mubr.f32.gmra.mrb[0].mxu0 %v194
  %v409 = vpop.f32.mrb[0].mxu0
  %v410 = vadd.f32 0.0, %v409
  %v411 = vpop.f32.mrb[0].mxu0
  %412 = vmatprep.mubr.f32.mxu0 %v198
  %413 = vmatmul.mubr.f32.gmra.mrb[0].mxu0 %v197
  %v414 = vpop.f32.mrb[0].mxu0
  %v415 = vadd.f32 0.0, %v414
  %v416 = vpop.f32.mrb[0].mxu0
  %417 = vdwg.mxu0
  %418 = vmatprep.subr.mxu0 0.0
  %419 = vmatpush1.msra.mxu0 %v232
  %420 = vmatprep.subr.mxu0 0.0
  %421 = vmatpush1.msra.mxu0 %v233
  %422 = vmatprep.subr.mxu0 0.0
  %423 = vmatpush1.msra.mxu0 %v234
  %424 = vmatprep.subr.mxu0 0.0
  %425 = vmatpush1.msra.mxu0 %v281
  %426 = vmatprep.subr.mxu0 0.0
  %427 = vmatpush1.msra.mxu0 0.0
  %428 = vmatprep.subr.mxu0 0.0
  %429 = vmatpush1.msra.mxu0 0.0
  %430 = vmatprep.subr.mxu0 0.0
  %431 = vmatpush1.msra.mxu0 0.0
  %432 = vmatprep.subr.mxu0 0.0
  %433 = vmatpush1.msra.mxu0 0.0
  %434 = vmatprep.subr.mxu0 0.0
  %435 = vmatpush1.msra.mxu0 0.0
  %436 = vmatprep.subr.mxu0 0.0
  %437 = vmatpush1.msra.mxu0 0.0
  %438 = vmatprep.subr.mxu0 0.0
  %439 = vmatpush1.msra.mxu0 0.0
  %440 = vmatprep.subr.mxu0 0.0
  %441 = vmatpush1.msra.mxu0 0.0
  %442 = vmatprep.subr.mxu0 0.0
  %443 = vmatpush1.msra.mxu0 0.0
  %444 = vmatprep.subr.mxu0 0.0
  %445 = vmatpush1.msra.mxu0 0.0
  %446 = vmatprep.subr.mxu0 0.0
  %447 = vmatpush1.msra.mxu0 0.0
  %448 = vmatprep.subr.mxu0 0.0
  %449 = vmatpush1.msra.mxu0 0.0
  %450 = vmatprep.subr.mxu0 0.0
  %451 = vmatpush1.msra.mxu0 0.0
  %452 = vmatprep.subr.mxu0 0.0
  %453 = vmatpush1.msra.mxu0 0.0
  %454 = vmatprep.subr.mxu0 0.0
  %455 = vmatpush1.msra.mxu0 0.0
  %456 = vmatprep.subr.mxu0 0.0
  %457 = vmatpush1.msra.mxu0 0.0
  %458 = vmatprep.subr.mxu0 0.0
  %459 = vmatpush1.msra.mxu0 0.0
  %460 = vmatprep.subr.mxu0 0.0
  %461 = vmatpush1.msra.mxu0 0.0
  %462 = vmatprep.subr.mxu0 0.0
  %463 = vmatpush1.msra.mxu0 0.0
  %464 = vmatprep.subr.mxu0 0.0
  %465 = vmatpush1.msra.mxu0 0.0
  %466 = vmatprep.subr.mxu0 0.0
  %467 = vmatpush1.msra.mxu0 0.0
  %468 = vmatprep.subr.mxu0 0.0
  %469 = vmatpush1.msra.mxu0 0.0
  %470 = vmatprep.subr.mxu0 0.0
  %471 = vmatpush1.msra.mxu0 0.0
  %472 = vmatprep.subr.mxu0 0.0
  %473 = vmatpush1.msra.mxu0 0.0
  %474 = vmatprep.subr.mxu0 0.0
  %475 = vmatpush1.msra.mxu0 0.0
  %476 = vmatprep.subr.mxu0 0.0
  %477 = vmatpush1.msra.mxu0 0.0
  %478 = vmatprep.subr.mxu0 0.0
  %479 = vmatpush1.msra.mxu0 0.0
  %480 = vmatprep.subr.mxu0 0.0
  %481 = vmatpush1.msra.mxu0 0.0
  %482 = vmatprep.mubr.f32.mxu0 0.0
  %483 = vmatmul.mubr.f32.gmra.mrb[0].mxu0 %v238
  %v484 = vpop.f32.mrb[0].mxu0
  %v485 = vadd.f32 %v350, %v484
  %v486 = vpop.f32.mrb[0].mxu0
  %487 = vmatprep.mubr.f32.mxu0 0.0
  %488 = vmatmul.mubr.f32.gmra.mrb[0].mxu0 %v241
  %v489 = vpop.f32.mrb[0].mxu0
  %v490 = vadd.f32 %v355, %v489
  %v491 = vpop.f32.mrb[0].mxu0
  %492 = vmatprep.mubr.f32.mxu0 0.0
  %493 = vmatmul.mubr.f32.gmra.mrb[0].mxu0 %v244
  %v494 = vpop.f32.mrb[0].mxu0
  %v495 = vadd.f32 %v360, %v494
  %v496 = vpop.f32.mrb[0].mxu0
  %497 = vmatprep.mubr.f32.mxu0 0.0
  %498 = vmatmul.mubr.f32.gmra.mrb[0].mxu0 %v247
  %v499 = vpop.f32.mrb[0].mxu0
  %v500 = vadd.f32 %v365, %v499
  %v501 = vpop.f32.mrb[0].mxu0
  %502 = vmatprep.mubr.f32.mxu0 0.0
  %503 = vmatmul.mubr.f32.gmra.mrb[0].mxu0 %v250
  %v504 = vpop.f32.mrb[0].mxu0
  %v505 = vadd.f32 %v370, %v504
  %v506 = vpop.f32.mrb[0].mxu0
  %507 = vmatprep.mubr.f32.mxu0 0.0
  %508 = vmatmul.mubr.f32.gmra.mrb[0].mxu0 %v253
  %v509 = vpop.f32.mrb[0].mxu0
  %v510 = vadd.f32 %v375, %v509
  %v511 = vpop.f32.mrb[0].mxu0
  %512 = vmatprep.mubr.f32.mxu0 0.0
  %513 = vmatmul.mubr.f32.gmra.mrb[0].mxu0 %v256
  %v514 = vpop.f32.mrb[0].mxu0
  %v515 = vadd.f32 %v380, %v514
  %v516 = vpop.f32.mrb[0].mxu0
  %517 = vmatprep.mubr.f32.mxu0 0.0
  %518 = vmatmul.mubr.f32.gmra.mrb[0].mxu0 %v259
  %v519 = vpop.f32.mrb[0].mxu0
  %v520 = vadd.f32 %v385, %v519
  %v521 = vpop.f32.mrb[0].mxu0
  %522 = vmatprep.mubr.f32.mxu0 0.0
  %523 = vmatmul.mubr.f32.gmra.mrb[0].mxu0 %v262
  %v524 = vpop.f32.mrb[0].mxu0
  %v525 = vadd.f32 %v390, %v524
  %v526 = vpop.f32.mrb[0].mxu0
  %527 = vmatprep.mubr.f32.mxu0 0.0
  %528 = vmatmul.mubr.f32.gmra.mrb[0].mxu0 %v265
  %v529 = vpop.f32.mrb[0].mxu0
  %v530 = vadd.f32 %v395, %v529
  %v531 = vpop.f32.mrb[0].mxu0
  %532 = vmatprep.mubr.f32.mxu0 0.0
  %533 = vmatmul.mubr.f32.gmra.mrb[0].mxu0 %v268
  %v534 = vpop.f32.mrb[0].mxu0
  %v535 = vadd.f32 %v400, %v534
  %v536 = vpop.f32.mrb[0].mxu0
  %537 = vmatprep.mubr.f32.mxu0 0.0
  %538 = vmatmul.mubr.f32.gmra.mrb[0].mxu0 %v271
  %v539 = vpop.f32.mrb[0].mxu0
  %v540 = vadd.f32 %v405, %v539
  %v541 = vpop.f32.mrb[0].mxu0
  %542 = vmatprep.mubr.f32.mxu0 0.0
  %543 = vmatmul.mubr.f32.gmra.mrb[0].mxu0 %v274
  %v544 = vpop.f32.mrb[0].mxu0
  %v545 = vadd.f32 %v410, %v544
  %v546 = vpop.f32.mrb[0].mxu0
  %547 = vmatprep.mubr.f32.mxu0 0.0
  %548 = vmatmul.mubr.f32.gmra.mrb[0].mxu0 %v277
  %v549 = vpop.f32.mrb[0].mxu0
  %v550 = vadd.f32 %v415, %v549
  %v551 = vpop.f32.mrb[0].mxu0
  %552 = vdwg.mxu0
  %v553 = vld [vmem:[%s2] sm:$0xff]
  %v554 = vld [vmem:[%s2 + $0x8] sm:$0xff]
  %v555 = vld [vmem:[%s2 + $0x10] sm:$0xff]
  %v556 = vld [vmem:[%s2 + $0x18] sm:$0xff]
  %v557 = vld [vmem:[%s2 + $0x20] sm:$0xff]
  %v558 = vld [vmem:[%s2 + $0x28] sm:$0xff]
  %v559 = vld [vmem:[%s2 + $0x30] sm:$0xff]
  %v560 = vld [vmem:[%s2 + $0x38] sm:$0xff]
  %v561 = vld [vmem:[%s2 + $0x40] sm:$0xff]
  %v562 = vld [vmem:[%s2 + $0x48] sm:$0xff]
  %v563 = vld [vmem:[%s2 + $0x50] sm:$0xff]
  %v564 = vld [vmem:[%s2 + $0x58] sm:$0xff]
  %v565 = vld [vmem:[%s2 + $0x60] sm:$0xff]
  %v566 = vld [vmem:[%s2 + $0x68] sm:$0xff]
  %v567 = vld [vmem:[%s2 + $0x70] sm:$0xff]
  %v568 = vld [vmem:[%s2 + $0x78] sm:$0xff]
  %v569 = vadd.f32 %v515, 0.0
  %v570 = vadd.f32 %v520, 0.0
  %v571 = vmul.f32 %v515, %v515
  %v572 = vmul.f32 %v520, %v520
  %v573 = vadd.f32 %v571, 0.0
  %v574 = vadd.f32 %v572, 0.0
  %v575 = vadd.f32 %v569, %v525
  %v576 = vadd.f32 %v570, %v530
  %v577 = vmul.f32 %v525, %v525
  %v578 = vmul.f32 %v530, %v530
  %v579 = vadd.f32 %v573, %v577
  %v580 = vadd.f32 %v574, %v578
  %vm581 = vcmask 130048
  %v583 = vsel %vm581, %v525, 0
  %v586 = vsel %vm581, %v530, 0
  %588 = vmatprep.subr.mxu0 0.0
  %589 = vmatpush1.msra.mxu0 %v555
  %590 = vmatprep.subr.mxu0 0.0
  %591 = vmatpush1.msra.mxu0 %v556
  %592 = vmatprep.subr.mxu0 0.0
  %593 = vmatpush1.msra.mxu0 0.0
  %594 = vmatprep.subr.mxu0 0.0
  %595 = vmatpush1.msra.mxu0 0.0
  %596 = vmatprep.subr.mxu0 0.0
  %597 = vmatpush1.msra.mxu0 0.0
  %598 = vmatprep.subr.mxu0 0.0
  %599 = vmatpush1.msra.mxu0 0.0
  %600 = vmatprep.subr.mxu0 0.0
  %601 = vmatpush1.msra.mxu0 0.0
  %602 = vmatprep.subr.mxu0 0.0
  %603 = vmatpush1.msra.mxu0 0.0
  %604 = vmatprep.subr.mxu0 0.0
  %605 = vmatpush1.msra.mxu0 0.0
  %606 = vmatprep.subr.mxu0 0.0
  %607 = vmatpush1.msra.mxu0 0.0
  %608 = vmatprep.subr.mxu0 0.0
  %609 = vmatpush1.msra.mxu0 0.0
  %610 = vmatprep.subr.mxu0 0.0
  %611 = vmatpush1.msra.mxu0 0.0
  %612 = vmatprep.subr.mxu0 0.0
  %613 = vmatpush1.msra.mxu0 0.0
  %614 = vmatprep.subr.mxu0 0.0
  %615 = vmatpush1.msra.mxu0 0.0
  %616 = vmatprep.subr.mxu0 0.0
  %617 = vmatpush1.msra.mxu0 0.0
  %618 = vmatprep.subr.mxu0 0.0
  %619 = vmatpush1.msra.mxu0 0.0
  %620 = vmatprep.subr.mxu0 0.0
  %621 = vmatpush1.msra.mxu0 0.0
  %622 = vmatprep.subr.mxu0 0.0
  %623 = vmatpush1.msra.mxu0 0.0
  %624 = vmatprep.subr.mxu0 0.0
  %625 = vmatpush1.msra.mxu0 0.0
  %626 = vmatprep.subr.mxu0 0.0
  %627 = vmatpush1.msra.mxu0 0.0
  %628 = vmatprep.subr.mxu0 0.0
  %629 = vmatpush1.msra.mxu0 0.0
  %630 = vmatprep.subr.mxu0 0.0
  %631 = vmatpush1.msra.mxu0 0.0
  %632 = vmatprep.subr.mxu0 0.0
  %633 = vmatpush1.msra.mxu0 0.0
  %634 = vmatprep.subr.mxu0 0.0
  %635 = vmatpush1.msra.mxu0 0.0
  %636 = vmatprep.subr.mxu0 0.0
  %637 = vmatpush1.msra.mxu0 0.0
  %638 = vmatprep.subr.mxu0 0.0
  %639 = vmatpush1.msra.mxu0 0.0
  %640 = vmatprep.subr.mxu0 0.0
  %641 = vmatpush1.msra.mxu0 0.0
  %642 = vmatprep.subr.mxu0 0.0
  %643 = vmatpush1.msra.mxu0 0.0
  %644 = vmatprep.subr.mxu0 0.0
  %645 = vmatpush1.msra.mxu0 0.0
  %646 = vmatprep.subr.mxu0 0.0
  %647 = vmatpush1.msra.mxu0 0.0
  %648 = vmatprep.subr.mxu0 0.0
  %649 = vmatpush1.msra.mxu0 0.0
  %650 = vmatprep.subr.mxu0 0.0
  %651 = vmatpush1.msra.mxu0 0.0
  %652 = vmatprep.mubr.f32.mxu0 0.0
  %653 = vmatmul.mubr.f32.gmra.mrb[0].mxu0 %v583
  %v654 = vpop.f32.mrb[0].mxu0
  %v655 = vadd.f32 0.0, %v654
  %v656 = vpop.f32.mrb[0].mxu0
  %657 = vmatprep.mubr.f32.mxu0 0.0
  %658 = vmatmul.mubr.f32.gmra.mrb[0].mxu0 %v586
  %v659 = vpop.f32.mrb[0].mxu0
  %v660 = vadd.f32 0.0, %v659
  %v661 = vpop.f32.mrb[0].mxu0
  %662 = vdwg.mxu0
  %v664 = vsel %vm581, %v515, 0
  %v667 = vsel %vm581, %v520, 0
  %669 = vmatprep.subr.mxu0 0.0
  %670 = vmatpush1.msra.mxu0 %v553
  %671 = vmatprep.subr.mxu0 0.0
  %672 = vmatpush1.msra.mxu0 %v554
  %673 = vmatprep.subr.mxu0 0.0
  %674 = vmatpush1.msra.mxu0 0.0
  %675 = vmatprep.subr.mxu0 0.0
  %676 = vmatpush1.msra.mxu0 0.0
  %677 = vmatprep.subr.mxu0 0.0
  %678 = vmatpush1.msra.mxu0 0.0
  %679 = vmatprep.subr.mxu0 0.0
  %680 = vmatpush1.msra.mxu0 0.0
  %681 = vmatprep.subr.mxu0 0.0
  %682 = vmatpush1.msra.mxu0 0.0
  %683 = vmatprep.subr.mxu0 0.0
  %684 = vmatpush1.msra.mxu0 0.0
  %685 = vmatprep.subr.mxu0 0.0
  %686 = vmatpush1.msra.mxu0 0.0
  %687 = vmatprep.subr.mxu0 0.0
  %688 = vmatpush1.msra.mxu0 0.0
  %689 = vmatprep.subr.mxu0 0.0
  %690 = vmatpush1.msra.mxu0 0.0
  %691 = vmatprep.subr.mxu0 0.0
  %692 = vmatpush1.msra.mxu0 0.0
  %693 = vmatprep.subr.mxu0 0.0
  %694 = vmatpush1.msra.mxu0 0.0
  %695 = vmatprep.subr.mxu0 0.0
  %696 = vmatpush1.msra.mxu0 0.0
  %697 = vmatprep.subr.mxu0 0.0
  %698 = vmatpush1.msra.mxu0 0.0
  %699 = vmatprep.subr.mxu0 0.0
  %700 = vmatpush1.msra.mxu0 0.0
  %701 = vmatprep.subr.mxu0 0.0
  %702 = vmatpush1.msra.mxu0 0.0
  %703 = vmatprep.subr.mxu0 0.0
  %704 = vmatpush1.msra.mxu0 0.0
  %705 = vmatprep.subr.mxu0 0.0
  %706 = vmatpush1.msra.mxu0 0.0
  %707 = vmatprep.subr.mxu0 0.0
  %708 = vmatpush1.msra.mxu0 0.0
  %709 = vmatprep.subr.mxu0 0.0
  %710 = vmatpush1.msra.mxu0 0.0
  %711 = vmatprep.subr.mxu0 0.0
  %712 = vmatpush1.msra.mxu0 0.0
  %713 = vmatprep.subr.mxu0 0.0
  %714 = vmatpush1.msra.mxu0 0.0
  %715 = vmatprep.subr.mxu0 0.0
  %716 = vmatpush1.msra.mxu0 0.0
  %717 = vmatprep.subr.mxu0 0.0
  %718 = vmatpush1.msra.mxu0 0.0
  %719 = vmatprep.subr.mxu0 0.0
  %720 = vmatpush1.msra.mxu0 0.0
  %721 = vmatprep.subr.mxu0 0.0
  %722 = vmatpush1.msra.mxu0 0.0
  %723 = vmatprep.subr.mxu0 0.0
  %724 = vmatpush1.msra.mxu0 0.0
  %725 = vmatprep.subr.mxu0 0.0
  %726 = vmatpush1.msra.mxu0 0.0
  %727 = vmatprep.subr.mxu0 0.0
  %728 = vmatpush1.msra.mxu0 0.0
  %729 = vmatprep.subr.mxu0 0.0
  %730 = vmatpush1.msra.mxu0 0.0
  %731 = vmatprep.subr.mxu0 0.0
  %732 = vmatpush1.msra.mxu0 0.0
  %733 = vmatprep.mubr.f32.mxu0 0.0
  %734 = vmatmul.mubr.f32.gmra.mrb[0].mxu0 %v664
  %v735 = vpop.f32.mrb[0].mxu0
  %v736 = vadd.f32 %v655, %v735
  %v737 = vpop.f32.mrb[0].mxu0
  %738 = vmatprep.mubr.f32.mxu0 0.0
  %739 = vmatmul.mubr.f32.gmra.mrb[0].mxu0 %v667
  %v740 = vpop.f32.mrb[0].mxu0
  %v741 = vadd.f32 %v660, %v740
  %v742 = vpop.f32.mrb[0].mxu0
  %743 = vdwg.mxu0
  %v744 = vadd.f32 %v575, %v535
  %v745 = vadd.f32 %v576, %v540
  %v746 = vmul.f32 %v535, %v535
  %v747 = vmul.f32 %v540, %v540
  %v748 = vadd.f32 %v579, %v746
  %v749 = vadd.f32 %v580, %v747
  %v751 = vsel %vm581, %v535, 0
  %v754 = vsel %vm581, %v540, 0
  %756 = vmatprep.subr.mxu0 0.0
  %757 = vmatpush1.msra.mxu0 %v557
  %758 = vmatprep.subr.mxu0 0.0
  %759 = vmatpush1.msra.mxu0 %v558
  %760 = vmatprep.subr.mxu0 0.0
  %761 = vmatpush1.msra.mxu0 0.0
  %762 = vmatprep.subr.mxu0 0.0
  %763 = vmatpush1.msra.mxu0 0.0
  %764 = vmatprep.subr.mxu0 0.0
  %765 = vmatpush1.msra.mxu0 0.0
  %766 = vmatprep.subr.mxu0 0.0
  %767 = vmatpush1.msra.mxu0 0.0
  %768 = vmatprep.subr.mxu0 0.0
  %769 = vmatpush1.msra.mxu0 0.0
  %770 = vmatprep.subr.mxu0 0.0
  %771 = vmatpush1.msra.mxu0 0.0
  %772 = vmatprep.subr.mxu0 0.0
  %773 = vmatpush1.msra.mxu0 0.0
  %774 = vmatprep.subr.mxu0 0.0
  %775 = vmatpush1.msra.mxu0 0.0
  %776 = vmatprep.subr.mxu0 0.0
  %777 = vmatpush1.msra.mxu0 0.0
  %778 = vmatprep.subr.mxu0 0.0
  %779 = vmatpush1.msra.mxu0 0.0
  %780 = vmatprep.subr.mxu0 0.0
  %781 = vmatpush1.msra.mxu0 0.0
  %782 = vmatprep.subr.mxu0 0.0
  %783 = vmatpush1.msra.mxu0 0.0
  %784 = vmatprep.subr.mxu0 0.0
  %785 = vmatpush1.msra.mxu0 0.0
  %786 = vmatprep.subr.mxu0 0.0
  %787 = vmatpush1.msra.mxu0 0.0
  %788 = vmatprep.subr.mxu0 0.0
  %789 = vmatpush1.msra.mxu0 0.0
  %790 = vmatprep.subr.mxu0 0.0
  %791 = vmatpush1.msra.mxu0 0.0
  %792 = vmatprep.subr.mxu0 0.0
  %793 = vmatpush1.msra.mxu0 0.0
  %794 = vmatprep.subr.mxu0 0.0
  %795 = vmatpush1.msra.mxu0 0.0
  %796 = vmatprep.subr.mxu0 0.0
  %797 = vmatpush1.msra.mxu0 0.0
  %798 = vmatprep.subr.mxu0 0.0
  %799 = vmatpush1.msra.mxu0 0.0
  %800 = vmatprep.subr.mxu0 0.0
  %801 = vmatpush1.msra.mxu0 0.0
  %802 = vmatprep.subr.mxu0 0.0
  %803 = vmatpush1.msra.mxu0 0.0
  %804 = vmatprep.subr.mxu0 0.0
  %805 = vmatpush1.msra.mxu0 0.0
  %806 = vmatprep.subr.mxu0 0.0
  %807 = vmatpush1.msra.mxu0 0.0
  %808 = vmatprep.subr.mxu0 0.0
  %809 = vmatpush1.msra.mxu0 0.0
  %810 = vmatprep.subr.mxu0 0.0
  %811 = vmatpush1.msra.mxu0 0.0
  %812 = vmatprep.subr.mxu0 0.0
  %813 = vmatpush1.msra.mxu0 0.0
  %814 = vmatprep.subr.mxu0 0.0
  %815 = vmatpush1.msra.mxu0 0.0
  %816 = vmatprep.subr.mxu0 0.0
  %817 = vmatpush1.msra.mxu0 0.0
  %818 = vmatprep.subr.mxu0 0.0
  %819 = vmatpush1.msra.mxu0 0.0
  %820 = vmatprep.mubr.f32.mxu0 0.0
  %821 = vmatmul.mubr.f32.gmra.mrb[0].mxu0 %v751
  %v822 = vpop.f32.mrb[0].mxu0
  %v823 = vadd.f32 0.0, %v822
  %v824 = vpop.f32.mrb[0].mxu0
  %825 = vmatprep.mubr.f32.mxu0 0.0
  %826 = vmatmul.mubr.f32.gmra.mrb[0].mxu0 %v754
  %v827 = vpop.f32.mrb[0].mxu0
  %v828 = vadd.f32 0.0, %v827
  %v829 = vpop.f32.mrb[0].mxu0
  %830 = vdwg.mxu0
  %v831 = vadd.f32 %v736, %v823
  %v832 = vadd.f32 %v741, %v828
  %v833 = vadd.f32 %v744, %v545
  %v834 = vadd.f32 %v745, %v550
  %v835 = vmul.f32 %v545, %v545
  %v836 = vmul.f32 %v550, %v550
  %v837 = vadd.f32 %v748, %v835
  %v838 = vadd.f32 %v749, %v836
  %v840 = vsel %vm581, %v545, 0
  %v843 = vsel %vm581, %v550, 0
  %845 = vmatprep.subr.mxu0 0.0
  %846 = vmatpush1.msra.mxu0 %v559
  %847 = vmatprep.subr.mxu0 0.0
  %848 = vmatpush1.msra.mxu0 %v560
  %849 = vmatprep.subr.mxu0 0.0
  %850 = vmatpush1.msra.mxu0 0.0
  %851 = vmatprep.subr.mxu0 0.0
  %852 = vmatpush1.msra.mxu0 0.0
  %853 = vmatprep.subr.mxu0 0.0
  %854 = vmatpush1.msra.mxu0 0.0
  %855 = vmatprep.subr.mxu0 0.0
  %856 = vmatpush1.msra.mxu0 0.0
  %857 = vmatprep.subr.mxu0 0.0
  %858 = vmatpush1.msra.mxu0 0.0
  %859 = vmatprep.subr.mxu0 0.0
  %860 = vmatpush1.msra.mxu0 0.0
  %861 = vmatprep.subr.mxu0 0.0
  %862 = vmatpush1.msra.mxu0 0.0
  %863 = vmatprep.subr.mxu0 0.0
  %864 = vmatpush1.msra.mxu0 0.0
  %865 = vmatprep.subr.mxu0 0.0
  %866 = vmatpush1.msra.mxu0 0.0
  %867 = vmatprep.subr.mxu0 0.0
  %868 = vmatpush1.msra.mxu0 0.0
  %869 = vmatprep.subr.mxu0 0.0
  %870 = vmatpush1.msra.mxu0 0.0
  %871 = vmatprep.subr.mxu0 0.0
  %872 = vmatpush1.msra.mxu0 0.0
  %873 = vmatprep.subr.mxu0 0.0
  %874 = vmatpush1.msra.mxu0 0.0
  %875 = vmatprep.subr.mxu0 0.0
  %876 = vmatpush1.msra.mxu0 0.0
  %877 = vmatprep.subr.mxu0 0.0
  %878 = vmatpush1.msra.mxu0 0.0
  %879 = vmatprep.subr.mxu0 0.0
  %880 = vmatpush1.msra.mxu0 0.0
  %881 = vmatprep.subr.mxu0 0.0
  %882 = vmatpush1.msra.mxu0 0.0
  %883 = vmatprep.subr.mxu0 0.0
  %884 = vmatpush1.msra.mxu0 0.0
  %885 = vmatprep.subr.mxu0 0.0
  %886 = vmatpush1.msra.mxu0 0.0
  %887 = vmatprep.subr.mxu0 0.0
  %888 = vmatpush1.msra.mxu0 0.0
  %889 = vmatprep.subr.mxu0 0.0
  %890 = vmatpush1.msra.mxu0 0.0
  %891 = vmatprep.subr.mxu0 0.0
  %892 = vmatpush1.msra.mxu0 0.0
  %893 = vmatprep.subr.mxu0 0.0
  %894 = vmatpush1.msra.mxu0 0.0
  %895 = vmatprep.subr.mxu0 0.0
  %896 = vmatpush1.msra.mxu0 0.0
  %897 = vmatprep.subr.mxu0 0.0
  %898 = vmatpush1.msra.mxu0 0.0
  %899 = vmatprep.subr.mxu0 0.0
  %900 = vmatpush1.msra.mxu0 0.0
  %901 = vmatprep.subr.mxu0 0.0
  %902 = vmatpush1.msra.mxu0 0.0
  %903 = vmatprep.subr.mxu0 0.0
  %904 = vmatpush1.msra.mxu0 0.0
  %905 = vmatprep.subr.mxu0 0.0
  %906 = vmatpush1.msra.mxu0 0.0
  %907 = vmatprep.subr.mxu0 0.0
  %908 = vmatpush1.msra.mxu0 0.0
  %909 = vmatprep.mubr.f32.mxu0 0.0
  %910 = vmatmul.mubr.f32.gmra.mrb[0].mxu0 %v840
  %v911 = vpop.f32.mrb[0].mxu0
  %v912 = vadd.f32 0.0, %v911
  %v913 = vpop.f32.mrb[0].mxu0
  %914 = vmatprep.mubr.f32.mxu0 0.0
  %915 = vmatmul.mubr.f32.gmra.mrb[0].mxu0 %v843
  %v916 = vpop.f32.mrb[0].mxu0
  %v917 = vadd.f32 0.0, %v916
  %v918 = vpop.f32.mrb[0].mxu0
  %919 = vdwg.mxu0
  %v920 = vadd.f32 %v831, %v912
  %v921 = vadd.f32 %v832, %v917
  %v922 = vlaneseq
  %v923 = vshrl.u32 %v922, 7
  %v924 = vsub.s32 0, %v923
  %v925 = vrot.slane %v567, %v924
  %v926 = vadd.f32 %v920, %v925
  %v927 = vadd.f32 %v921, %v925
  %v928 = vmax.f32 %v926, 0.0
  %v929 = vmax.f32 %v927, 0.0
  %v930 = vlaneseq
  %v931 = vshrl.u32 %v930, 7
  %v932 = vsub.s32 0, %v931
  %v933 = vrot.slane %v568, %v932
  %v935 = vsel %vm581, %v928, 0
  %v938 = vsel %vm581, %v929, 0
  %940 = vmatprep.subr.mxu0 0.0
  %941 = vmatpush1.msra.mxu0 %v561
  %942 = vmatprep.subr.mxu0 0.0
  %943 = vmatpush1.msra.mxu0 %v562
  %944 = vmatprep.subr.mxu0 0.0
  %945 = vmatpush1.msra.mxu0 0.0
  %946 = vmatprep.subr.mxu0 0.0
  %947 = vmatpush1.msra.mxu0 0.0
  %948 = vmatprep.subr.mxu0 0.0
  %949 = vmatpush1.msra.mxu0 0.0
  %950 = vmatprep.subr.mxu0 0.0
  %951 = vmatpush1.msra.mxu0 0.0
  %952 = vmatprep.subr.mxu0 0.0
  %953 = vmatpush1.msra.mxu0 0.0
  %954 = vmatprep.subr.mxu0 0.0
  %955 = vmatpush1.msra.mxu0 0.0
  %956 = vmatprep.subr.mxu0 0.0
  %957 = vmatpush1.msra.mxu0 0.0
  %958 = vmatprep.subr.mxu0 0.0
  %959 = vmatpush1.msra.mxu0 0.0
  %960 = vmatprep.subr.mxu0 0.0
  %961 = vmatpush1.msra.mxu0 0.0
  %962 = vmatprep.subr.mxu0 0.0
  %963 = vmatpush1.msra.mxu0 0.0
  %964 = vmatprep.subr.mxu0 0.0
  %965 = vmatpush1.msra.mxu0 0.0
  %966 = vmatprep.subr.mxu0 0.0
  %967 = vmatpush1.msra.mxu0 0.0
  %968 = vmatprep.subr.mxu0 0.0
  %969 = vmatpush1.msra.mxu0 0.0
  %970 = vmatprep.subr.mxu0 0.0
  %971 = vmatpush1.msra.mxu0 0.0
  %972 = vmatprep.subr.mxu0 0.0
  %973 = vmatpush1.msra.mxu0 0.0
  %974 = vmatprep.subr.mxu0 0.0
  %975 = vmatpush1.msra.mxu0 0.0
  %976 = vmatprep.subr.mxu0 0.0
  %977 = vmatpush1.msra.mxu0 0.0
  %978 = vmatprep.subr.mxu0 0.0
  %979 = vmatpush1.msra.mxu0 0.0
  %980 = vmatprep.subr.mxu0 0.0
  %981 = vmatpush1.msra.mxu0 0.0
  %982 = vmatprep.subr.mxu0 0.0
  %983 = vmatpush1.msra.mxu0 0.0
  %984 = vmatprep.subr.mxu0 0.0
  %985 = vmatpush1.msra.mxu0 0.0
  %986 = vmatprep.subr.mxu0 0.0
  %987 = vmatpush1.msra.mxu0 0.0
  %988 = vmatprep.subr.mxu0 0.0
  %989 = vmatpush1.msra.mxu0 0.0
  %990 = vmatprep.subr.mxu0 0.0
  %991 = vmatpush1.msra.mxu0 0.0
  %992 = vmatprep.subr.mxu0 0.0
  %993 = vmatpush1.msra.mxu0 0.0
  %994 = vmatprep.subr.mxu0 0.0
  %995 = vmatpush1.msra.mxu0 0.0
  %996 = vmatprep.subr.mxu0 0.0
  %997 = vmatpush1.msra.mxu0 0.0
  %998 = vmatprep.subr.mxu0 0.0
  %999 = vmatpush1.msra.mxu0 0.0
  %1000 = vmatprep.subr.mxu0 0.0
  %1001 = vmatpush1.msra.mxu0 0.0
  %1002 = vmatprep.subr.mxu0 0.0
  %1003 = vmatpush1.msra.mxu0 0.0
  %1004 = vmatprep.mubr.f32.mxu0 0.0
  %1005 = vmatmul.mubr.f32.gmra.mrb[0].mxu0 %v935
  %v1006 = vpop.f32.mrb[0].mxu0
  %v1007 = vadd.f32 %v933, %v1006
  %v1008 = vpop.f32.mrb[0].mxu0
  %1009 = vmatprep.mubr.f32.mxu0 0.0
  %1010 = vmatmul.mubr.f32.gmra.mrb[0].mxu0 %v938
  %v1011 = vpop.f32.mrb[0].mxu0
  %v1012 = vadd.f32 %v933, %v1011
  %v1013 = vpop.f32.mrb[0].mxu0
  %1014 = vdwg.mxu0
  %v1015 = vmax.f32 %v1007, 0.0
  %v1016 = vmax.f32 %v1012, 0.0
  %v1017 = vmul.f32 %v833, %v833
  %v1018 = vmul.f32 %v834, %v834
  %v1019 = vsub.f32 %v1017, %v837
  %v1020 = vsub.f32 %v1018, %v838
  %v1021 = vmul.f32 %v1019, 0.5
  %v1022 = vmul.f32 %v1020, 0.5
  %1024 = vset.pattern.permute.xlu0 10
  %1025 = vperm.xlu0 %1024, %v833
  %v1026 = vpop.permute.xlu0 %1025
  %1029 = vset.pattern.permute.xlu0 10
  %1030 = vperm.xlu0 %1029, %v834
  %v1031 = vpop.permute.xlu0 %1030
  %v1033 = vadd.f32 %v1021, %v1026
  %v1034 = vadd.f32 %v1022, %v1031
  %v1036 = vsel %vm581, %v1015, 0
  %v1039 = vsel %vm581, %v1016, 0
  %1041 = vmatprep.subr.mxu0 0.0
  %1042 = vmatpush1.msra.mxu0 %v565
  %1043 = vmatprep.subr.mxu0 0.0
  %1044 = vmatpush1.msra.mxu0 %v566
  %1045 = vmatprep.subr.mxu0 0.0
  %1046 = vmatpush1.msra.mxu0 0.0
  %1047 = vmatprep.subr.mxu0 0.0
  %1048 = vmatpush1.msra.mxu0 0.0
  %1049 = vmatprep.subr.mxu0 0.0
  %1050 = vmatpush1.msra.mxu0 0.0
  %1051 = vmatprep.subr.mxu0 0.0
  %1052 = vmatpush1.msra.mxu0 0.0
  %1053 = vmatprep.subr.mxu0 0.0
  %1054 = vmatpush1.msra.mxu0 0.0
  %1055 = vmatprep.subr.mxu0 0.0
  %1056 = vmatpush1.msra.mxu0 0.0
  %1057 = vmatprep.subr.mxu0 0.0
  %1058 = vmatpush1.msra.mxu0 0.0
  %1059 = vmatprep.subr.mxu0 0.0
  %1060 = vmatpush1.msra.mxu0 0.0
  %1061 = vmatprep.subr.mxu0 0.0
  %1062 = vmatpush1.msra.mxu0 0.0
  %1063 = vmatprep.subr.mxu0 0.0
  %1064 = vmatpush1.msra.mxu0 0.0
  %1065 = vmatprep.subr.mxu0 0.0
  %1066 = vmatpush1.msra.mxu0 0.0
  %1067 = vmatprep.subr.mxu0 0.0
  %1068 = vmatpush1.msra.mxu0 0.0
  %1069 = vmatprep.subr.mxu0 0.0
  %1070 = vmatpush1.msra.mxu0 0.0
  %1071 = vmatprep.subr.mxu0 0.0
  %1072 = vmatpush1.msra.mxu0 0.0
  %1073 = vmatprep.subr.mxu0 0.0
  %1074 = vmatpush1.msra.mxu0 0.0
  %1075 = vmatprep.subr.mxu0 0.0
  %1076 = vmatpush1.msra.mxu0 0.0
  %1077 = vmatprep.subr.mxu0 0.0
  %1078 = vmatpush1.msra.mxu0 0.0
  %1079 = vmatprep.subr.mxu0 0.0
  %1080 = vmatpush1.msra.mxu0 0.0
  %1081 = vmatprep.subr.mxu0 0.0
  %1082 = vmatpush1.msra.mxu0 0.0
  %1083 = vmatprep.subr.mxu0 0.0
  %1084 = vmatpush1.msra.mxu0 0.0
  %1085 = vmatprep.subr.mxu0 0.0
  %1086 = vmatpush1.msra.mxu0 0.0
  %1087 = vmatprep.subr.mxu0 0.0
  %1088 = vmatpush1.msra.mxu0 0.0
  %1089 = vmatprep.subr.mxu0 0.0
  %1090 = vmatpush1.msra.mxu0 0.0
  %1091 = vmatprep.subr.mxu0 0.0
  %1092 = vmatpush1.msra.mxu0 0.0
  %1093 = vmatprep.subr.mxu0 0.0
  %1094 = vmatpush1.msra.mxu0 0.0
  %1095 = vmatprep.subr.mxu0 0.0
  %1096 = vmatpush1.msra.mxu0 0.0
  %1097 = vmatprep.subr.mxu0 0.0
  %1098 = vmatpush1.msra.mxu0 0.0
  %1099 = vmatprep.subr.mxu0 0.0
  %1100 = vmatpush1.msra.mxu0 0.0
  %1101 = vmatprep.subr.mxu0 0.0
  %1102 = vmatpush1.msra.mxu0 0.0
  %1103 = vmatprep.subr.mxu0 0.0
  %1104 = vmatpush1.msra.mxu0 0.0
  %1105 = vmatprep.mubr.f32.mxu0 0.0
  %1106 = vmatmul.mubr.f32.gmra.mrb[0].mxu0 %v1036
  %v1107 = vpop.f32.mrb[0].mxu0
  %v1108 = vadd.f32 0.0, %v1107
  %v1109 = vpop.f32.mrb[0].mxu0
  %1110 = vmatprep.mubr.f32.mxu0 0.0
  %1111 = vmatmul.mubr.f32.gmra.mrb[0].mxu0 %v1039
  %v1112 = vpop.f32.mrb[0].mxu0
  %v1113 = vadd.f32 0.0, %v1112
  %v1114 = vpop.f32.mrb[0].mxu0
  %1115 = vdwg.mxu0
  %v1117 = vsel %vm581, %v1033, 0
  %v1120 = vsel %vm581, %v1034, 0
  %1122 = vmatprep.subr.mxu0 0.0
  %1123 = vmatpush1.msra.mxu0 %v563
  %1124 = vmatprep.subr.mxu0 0.0
  %1125 = vmatpush1.msra.mxu0 %v564
  %1126 = vmatprep.subr.mxu0 0.0
  %1127 = vmatpush1.msra.mxu0 0.0
  %1128 = vmatprep.subr.mxu0 0.0
  %1129 = vmatpush1.msra.mxu0 0.0
  %1130 = vmatprep.subr.mxu0 0.0
  %1131 = vmatpush1.msra.mxu0 0.0
  %1132 = vmatprep.subr.mxu0 0.0
  %1133 = vmatpush1.msra.mxu0 0.0
  %1134 = vmatprep.subr.mxu0 0.0
  %1135 = vmatpush1.msra.mxu0 0.0
  %1136 = vmatprep.subr.mxu0 0.0
  %1137 = vmatpush1.msra.mxu0 0.0
  %1138 = vmatprep.subr.mxu0 0.0
  %1139 = vmatpush1.msra.mxu0 0.0
  %1140 = vmatprep.subr.mxu0 0.0
  %1141 = vmatpush1.msra.mxu0 0.0
  %1142 = vmatprep.subr.mxu0 0.0
  %1143 = vmatpush1.msra.mxu0 0.0
  %1144 = vmatprep.subr.mxu0 0.0
  %1145 = vmatpush1.msra.mxu0 0.0
  %1146 = vmatprep.subr.mxu0 0.0
  %1147 = vmatpush1.msra.mxu0 0.0
  %1148 = vmatprep.subr.mxu0 0.0
  %1149 = vmatpush1.msra.mxu0 0.0
  %1150 = vmatprep.subr.mxu0 0.0
  %1151 = vmatpush1.msra.mxu0 0.0
  %1152 = vmatprep.subr.mxu0 0.0
  %1153 = vmatpush1.msra.mxu0 0.0
  %1154 = vmatprep.subr.mxu0 0.0
  %1155 = vmatpush1.msra.mxu0 0.0
  %1156 = vmatprep.subr.mxu0 0.0
  %1157 = vmatpush1.msra.mxu0 0.0
  %1158 = vmatprep.subr.mxu0 0.0
  %1159 = vmatpush1.msra.mxu0 0.0
  %1160 = vmatprep.subr.mxu0 0.0
  %1161 = vmatpush1.msra.mxu0 0.0
  %1162 = vmatprep.subr.mxu0 0.0
  %1163 = vmatpush1.msra.mxu0 0.0
  %1164 = vmatprep.subr.mxu0 0.0
  %1165 = vmatpush1.msra.mxu0 0.0
  %1166 = vmatprep.subr.mxu0 0.0
  %1167 = vmatpush1.msra.mxu0 0.0
  %1168 = vmatprep.subr.mxu0 0.0
  %1169 = vmatpush1.msra.mxu0 0.0
  %1170 = vmatprep.subr.mxu0 0.0
  %1171 = vmatpush1.msra.mxu0 0.0
  %1172 = vmatprep.subr.mxu0 0.0
  %1173 = vmatpush1.msra.mxu0 0.0
  %1174 = vmatprep.subr.mxu0 0.0
  %1175 = vmatpush1.msra.mxu0 0.0
  %1176 = vmatprep.subr.mxu0 0.0
  %1177 = vmatpush1.msra.mxu0 0.0
  %1178 = vmatprep.subr.mxu0 0.0
  %1179 = vmatpush1.msra.mxu0 0.0
  %1180 = vmatprep.subr.mxu0 0.0
  %1181 = vmatpush1.msra.mxu0 0.0
  %1182 = vmatprep.subr.mxu0 0.0
  %1183 = vmatpush1.msra.mxu0 0.0
  %1184 = vmatprep.subr.mxu0 0.0
  %1185 = vmatpush1.msra.mxu0 0.0
  %1186 = vmatprep.mubr.f32.mxu0 0.0
  %1187 = vmatmul.mubr.f32.gmra.mrb[0].mxu0 %v1117
  %v1188 = vpop.f32.mrb[0].mxu0
  %v1189 = vadd.f32 %v1108, %v1188
  %v1190 = vpop.f32.mrb[0].mxu0
  %1191 = vmatprep.mubr.f32.mxu0 0.0
  %1192 = vmatmul.mubr.f32.gmra.mrb[0].mxu0 %v1120
  %v1193 = vpop.f32.mrb[0].mxu0
  %v1194 = vadd.f32 %v1113, %v1193
  %v1195 = vpop.f32.mrb[0].mxu0
  %1196 = vdwg.mxu0
  %v1197 = vmul.f32 %v485, %v495
  %v1198 = vmul.f32 %v490, %v500
  %v1199 = vsel %vm581, %v1197, 0.0
  %1200 = vadd.xlane.f32.xlu0 %v1199
  %v1201 = vpop.xlane.xlu0 %1200
  %v1202 = vsel %vm581, %v1198, 0.0
  %1203 = vadd.xlane.f32.xlu0 %v1202
  %v1204 = vpop.xlane.xlu0 %1203
  %v1205 = vmul.f32 %v505, %v1189
  %v1206 = vmul.f32 %v510, %v1194
  %v1207 = vsel %vm581, %v1205, 0.0
  %1208 = vadd.xlane.f32.xlu0 %v1207
  %v1209 = vpop.xlane.xlu0 %1208
  %v1210 = vsel %vm581, %v1206, 0.0
  %1211 = vadd.xlane.f32.xlu0 %v1210
  %v1212 = vpop.xlane.xlu0 %1211
  %v1213 = vadd.f32 %v1201, %v1209
  %v1214 = vadd.f32 %v1204, %v1212
  %vm1215 = vcmask 7168
  %1216 = vst.msk [vmem:[%s3] sm:$0xff] %vm1215, %v1213
  %1217 = vst.msk [vmem:[%s3 + $0x8] sm:$0xff] %vm1215, %v1214
  // Predicated region
  $region14: #{contextual_bpr_v3.1} parent=0 // pred_check
    _
  $region15: #{contextual_bpr_v3.1} parent=0 // pred_check_branch
    %1219 = sbr.rel (0) target = $region17
  $region16: #{contextual_bpr_v3.1} parent=0 // pred_region
    _
  $region17: #{contextual_bpr_v3.1} parent=0 // pred_fallthru
    _
  // Predicated region
  $region18: #{contextual_bpr_v3.1} parent=0 // pred_check
    _
  $region19: #{contextual_bpr_v3.1} parent=0 // pred_check_branch
    %1221 = sbr.rel (0) target = $region21
  $region20: #{contextual_bpr_v3.1} parent=0 // pred_region
    _
  $region21: #{contextual_bpr_v3.1} parent=0 // pred_fallthru
    _

</llo_original>
